<compile_context>
chip_gen: v5e
topology: v5e:2x2
jax: 0.10.0
libtpu: 0.0.40
codegen_flags: <defaults>
</compile_context>

<pallas_src>
import functools

import numpy as np
import jax
import jax.numpy as jnp
from jax.experimental import pallas as pl
from jax.experimental.pallas import tpu as pltpu

EPS = 1e-12


def _handshake_kernel(gcat_ref, condb_ref, condw_ref, v_ref, wv_ref, bcat_ref,
                      out_ref, *, inv_h):
    """Per row-tile: cat = relu(g@Wg + v@Wv + b); cln = CLN(v | g); out = cat + cln.

    The g-projections (g@Wg, g@Wb + ln_b, g@Ww + ln_w) arrive precomputed per pair
    in gcat_ref / condb_ref / condw_ref; only v@Wv runs on the MXU here.
    """
    v = v_ref[...].astype(jnp.float32)                       # (T, Hp) visible rows
    w = wv_ref[...]                                          # (Hp, Hp)

    # ---- 'cat' path: relu(Linear(concat(g, v))) with the g-half hoisted ----
    cat = (jnp.dot(v.astype(w.dtype), w, preferred_element_type=jnp.float32)
           + gcat_ref[...] + bcat_ref[...])
    cat = jnp.maximum(cat, 0.0)

    # ---- 'cln' path: conditional LayerNorm(visible | cond=guide) ----
    # One-pass statistics with the true hidden size (pad lanes are zero, so the
    # sums are exact).
    mean = jnp.sum(v, axis=-1, keepdims=True) * inv_h        # (T, 1)
    msq = jnp.sum(v * v, axis=-1, keepdims=True) * inv_h     # (T, 1)
    var = msq - mean * mean
    std = (var + EPS) ** 2            # NB: reference uses **2, not sqrt
    inv_std = pl.reciprocal(std)      # exact; one reciprocal per row (EUP)
    cln = (v - mean) * inv_std * condw_ref[...] + condb_ref[...]

    out_ref[...] = (cat + cln).astype(out_ref.dtype)


def handshaking_pallas(seq_hiddens, params, *, tile_rows=256,
                       matmul_dtype=jnp.float32):
    """seq_hiddens: (B, L, H) float32 -> (B, L*(L+1)//2, H) float32."""
    B, L, H = seq_hiddens.shape
    idx_i, idx_j = jnp.triu_indices(L)        # row-major upper triangle
    P = idx_i.shape[0]
    N = B * P

    # ---- pad hidden dim to a lane-dense multiple of 128 ----
    Hp = max(128, pl.cdiv(H, 128) * 128)
    pad_h = Hp - H

    def pad_last(x):
        return jnp.pad(x, [(0, 0)] * (x.ndim - 1) + [(0, pad_h)]) if pad_h else x

    def pad_mat(m):  # (H, H) -> (Hp, Hp), zero-padded
        return jnp.pad(m, ((0, pad_h), (0, pad_h))) if pad_h else m

    seq = pad_last(seq_hiddens)                               # (B, L, Hp)

    w_cat = params["w_cat"]                                   # (H, 2H) = [Wg | Wv]
    wg_t = pad_mat(w_cat[:, :H].T)                            # (Hp, Hp)
    wv_t = pad_mat(w_cat[:, H:].T)                            # (Hp, Hp)
    wb_t = pad_mat(params["w_bias_dense"].T)                  # (Hp, Hp)
    ww_t = pad_mat(params["w_weight_dense"].T)                # (Hp, Hp)
    b_cat = pad_last(params["b_cat"]).reshape(1, Hp)
    ln_b = pad_last(params["ln_bias"]).reshape(1, Hp)
    ln_w = pad_last(params["ln_weight"]).reshape(1, Hp)

    # ---- hoist guide projections: one fused (Hp, 3Hp) matmul per TOKEN ----
    w_guide = jnp.concatenate([wg_t, wb_t, ww_t], axis=1)     # (Hp, 3Hp)
    g_proj = jnp.einsum("blh,hk->blk", seq, w_guide)          # (B, L, 3Hp)
    g_cat = g_proj[..., :Hp]
    cond_b = g_proj[..., Hp:2 * Hp] + ln_b
    cond_w = g_proj[..., 2 * Hp:] + ln_w

    # ---- gather the upper-triangular pair sequence and flatten to rows ----
    g_cat_rows = g_cat[:, idx_i].reshape(N, Hp)
    condb_rows = cond_b[:, idx_i].reshape(N, Hp)
    condw_rows = cond_w[:, idx_i].reshape(N, Hp)
    vis_rows = seq[:, idx_j].reshape(N, Hp)

    # ---- pick a tile size (multiple of 8 rows, capped by N and VMEM budget) ----
    tile_rows = max(8, (int(tile_rows) // 8) * 8)
    tile_rows = min(tile_rows, pl.cdiv(N, 8) * 8)

    w_itemsize = np.dtype(matmul_dtype).itemsize

    def _pipeline_vmem_bytes(t):
        row_inputs = 4 * t * Hp * 4             # gcat, condb, condw, visible (f32)
        out_bytes = t * Hp * 4
        w_bytes = Hp * Hp * w_itemsize + Hp * 4  # Wv + b_cat
        return 2 * (row_inputs + out_bytes + w_bytes)   # double-buffered

    while tile_rows > 8 and _pipeline_vmem_bytes(tile_rows) > (32 << 20):
        tile_rows = max(8, (tile_rows // 2 // 8) * 8)

    vmem_limit = int(min(2 * _pipeline_vmem_bytes(tile_rows) + (16 << 20), 48 << 20))

    Npad = pl.cdiv(N, tile_rows) * tile_rows
    if Npad != N:
        pad_r = Npad - N

        def pad_rows(x):
            return jnp.pad(x, ((0, pad_r), (0, 0)))

        g_cat_rows = pad_rows(g_cat_rows)
        condb_rows = pad_rows(condb_rows)
        condw_rows = pad_rows(condw_rows)
        vis_rows = pad_rows(vis_rows)

    wv_mm = wv_t.astype(matmul_dtype)

    row_spec = pl.BlockSpec((tile_rows, Hp), lambda i: (i, 0))
    wv_spec = pl.BlockSpec((Hp, Hp), lambda i: (0, 0))
    vec_spec = pl.BlockSpec((1, Hp), lambda i: (0, 0))

    kernel = functools.partial(_handshake_kernel, inv_h=1.0 / H)

    out = pl.pallas_call(
        kernel,
        out_shape=jax.ShapeDtypeStruct((Npad, Hp), seq_hiddens.dtype),
        grid_spec=pltpu.PrefetchScalarGridSpec(
            num_scalar_prefetch=0,
            grid=(Npad // tile_rows,),
            in_specs=[row_spec, row_spec, row_spec, row_spec, wv_spec, vec_spec],
            out_specs=row_spec,
        ),
        compiler_params=pltpu.CompilerParams(
            dimension_semantics=("parallel",),
            vmem_limit_bytes=vmem_limit),
    )(g_cat_rows, condb_rows, condw_rows, vis_rows, wv_mm, b_cat)

    return out[:N, :H].reshape(B, P, H)


def handshaking_reference(seq_hiddens, params):
    """Pure-JAX reference mirroring the PyTorch forward."""
    B, L, H = seq_hiddens.shape
    idx_i, idx_j = jnp.triu_indices(L)
    g = seq_hiddens[:, idx_i, :]
    v = seq_hiddens[:, idx_j, :]

    # cat path
    cat_in = jnp.concatenate([g, v], axis=-1)
    cat = jnp.maximum(cat_in @ params["w_cat"].T + params["b_cat"], 0.0)

    # cln path
    bias = g @ params["w_bias_dense"].T + params["ln_bias"]
    weight = g @ params["w_weight_dense"].T + params["ln_weight"]
    mean = jnp.mean(v, axis=-1, keepdims=True)
    xc = v - mean
    var = jnp.mean(xc ** 2, axis=-1, keepdims=True)
    std = (var + EPS) ** 2
    cln = xc / std * weight + bias
    return cat + cln


def init_params(key, hidden_size):
    H = hidden_size
    k1, k2, k3, k4 = jax.random.split(key, 4)
    return {
        "w_cat": jax.random.normal(k1, (H, 2 * H), jnp.float32) * 0.05,
        "b_cat": jax.random.normal(k2, (H,), jnp.float32) * 0.05,
        "w_bias_dense": jax.random.normal(k3, (H, H), jnp.float32) * 0.02,
        "w_weight_dense": jax.random.normal(k4, (H, H), jnp.float32) * 0.02,
        "ln_bias": jnp.zeros((H,), jnp.float32),
        "ln_weight": jnp.ones((H,), jnp.float32),
    }


if __name__ == "__main__":
    B, L, H = 2, 8, 32
    key = jax.random.PRNGKey(0)
    k_in, k_par = jax.random.split(key)
    seq_hiddens = jax.random.normal(k_in, (B, L, H), jnp.float32)
    params = init_params(k_par, H)

    out = handshaking_pallas(seq_hiddens, params)
    out = jax.block_until_ready(out)

    ref = handshaking_reference(seq_hiddens, params)
    assert out.shape == (B, L * (L + 1) // 2, H), out.shape
    assert jnp.allclose(out, ref, atol=1e-4, rtol=1e-4), float(
        jnp.max(jnp.abs(out - ref)))

    print("KERNEL_OK")
</pallas_src>

<mosaic_0001>
module attributes {stable_mosaic.version = 11 : i64} {
  func.func @_handshake_kernel(%arg0: i32, %arg1: memref<72x128xf32, #tpu.memory_space<vmem>>, %arg2: memref<72x128xf32, #tpu.memory_space<vmem>>, %arg3: memref<72x128xf32, #tpu.memory_space<vmem>>, %arg4: memref<72x128xf32, #tpu.memory_space<vmem>>, %arg5: memref<128x128xf32, #tpu.memory_space<vmem>>, %arg6: memref<1x128xf32, #tpu.memory_space<vmem>>, %arg7: memref<72x128xf32, #tpu.memory_space<vmem>>) attributes {dimension_semantics = [#tpu.dimension_semantics<parallel>], iteration_bounds = array<i64: 1>, scalar_prefetch = 0 : i64, scratch_operands = 0 : i64, tpu.core_type = #tpu.core_type<tc>, window_params = [{transform_indices = @transform_0, window_bounds = array<i64: 72, 128>}, {transform_indices = @transform_1, window_bounds = array<i64: 72, 128>}, {transform_indices = @transform_2, window_bounds = array<i64: 72, 128>}, {transform_indices = @transform_3, window_bounds = array<i64: 72, 128>}, {pipeline_mode = #tpu.pipeline_mode<synchronous>, transform_indices = @transform_4, window_bounds = array<i64: 128, 128>}, {pipeline_mode = #tpu.pipeline_mode<synchronous>, transform_indices = @transform_5, window_bounds = array<i64: 1, 128>}, {transform_indices = @transform_6, window_bounds = array<i64: 72, 128>}]} {
    %c0 = arith.constant 0 : index
    %c0_0 = arith.constant 0 : index
    %0 = vector.load %arg4[%c0, %c0_0] : memref<72x128xf32, #tpu.memory_space<vmem>>, vector<72x128xf32>
    %c0_1 = arith.constant 0 : index
    %c0_2 = arith.constant 0 : index
    %1 = vector.load %arg5[%c0_1, %c0_2] : memref<128x128xf32, #tpu.memory_space<vmem>>, vector<128x128xf32>
    %cst = arith.constant dense<0.000000e+00> : vector<72x128xf32>
    %2 = tpu.matmul %0, %1, %cst {dimension_numbers = #tpu.dot_dimension_numbers<[1], [0], [0], [1], [0, 0, 1, 1], [], []>} : vector<72x128xf32>, vector<128x128xf32>, vector<72x128xf32> -> vector<72x128xf32>
    %c0_3 = arith.constant 0 : index
    %c0_4 = arith.constant 0 : index
    %3 = vector.load %arg1[%c0_3, %c0_4] : memref<72x128xf32, #tpu.memory_space<vmem>>, vector<72x128xf32>
    %4 = arith.addf %2, %3 : vector<72x128xf32>
    %c0_5 = arith.constant 0 : index
    %c0_6 = arith.constant 0 : index
    %5 = vector.load %arg6[%c0_5, %c0_6] : memref<1x128xf32, #tpu.memory_space<vmem>>, vector<1x128xf32>
    %6 = vector.broadcast %5 : vector<1x128xf32> to vector<72x128xf32>
    %7 = arith.addf %4, %6 : vector<72x128xf32>
    %cst_7 = arith.constant 0.000000e+00 : f32
    %8 = vector.broadcast %cst_7 : f32 to vector<72x128xf32>
    %9 = arith.maximumf %7, %8 : vector<72x128xf32>
    %cst_8 = arith.constant dense<0.000000e+00> : vector<72xf32>
    %10 = vector.multi_reduction <add>, %0, %cst_8 [1] : vector<72x128xf32> to vector<72xf32>
    %11 = vector.shape_cast %10 : vector<72xf32> to vector<72x1xf32>
    %cst_9 = arith.constant 3.125000e-02 : f32
    %12 = vector.broadcast %cst_9 : f32 to vector<72x1xf32>
    %13 = arith.mulf %11, %12 : vector<72x1xf32>
    %14 = arith.mulf %0, %0 : vector<72x128xf32>
    %cst_10 = arith.constant dense<0.000000e+00> : vector<72xf32>
    %15 = vector.multi_reduction <add>, %14, %cst_10 [1] : vector<72x128xf32> to vector<72xf32>
    %16 = vector.shape_cast %15 : vector<72xf32> to vector<72x1xf32>
    %cst_11 = arith.constant 3.125000e-02 : f32
    %17 = vector.broadcast %cst_11 : f32 to vector<72x1xf32>
    %18 = arith.mulf %16, %17 : vector<72x1xf32>
    %19 = arith.mulf %13, %13 : vector<72x1xf32>
    %20 = arith.subf %18, %19 : vector<72x1xf32>
    %cst_12 = arith.constant 9.99999996E-13 : f32
    %21 = vector.broadcast %cst_12 : f32 to vector<72x1xf32>
    %22 = arith.addf %20, %21 : vector<72x1xf32>
    %23 = arith.mulf %22, %22 : vector<72x1xf32>
    %24 = tpu.reciprocal %23 : vector<72x1xf32> -> vector<72x1xf32>
    %25 = vector.broadcast %13 : vector<72x1xf32> to vector<72x128xf32>
    %26 = arith.subf %0, %25 : vector<72x128xf32>
    %27 = vector.broadcast %24 : vector<72x1xf32> to vector<72x128xf32>
    %28 = arith.mulf %26, %27 : vector<72x128xf32>
    %c0_13 = arith.constant 0 : index
    %c0_14 = arith.constant 0 : index
    %29 = vector.load %arg3[%c0_13, %c0_14] : memref<72x128xf32, #tpu.memory_space<vmem>>, vector<72x128xf32>
    %30 = arith.mulf %28, %29 : vector<72x128xf32>
    %c0_15 = arith.constant 0 : index
    %c0_16 = arith.constant 0 : index
    %31 = vector.load %arg2[%c0_15, %c0_16] : memref<72x128xf32, #tpu.memory_space<vmem>>, vector<72x128xf32>
    %32 = arith.addf %30, %31 : vector<72x128xf32>
    %33 = arith.addf %9, %32 : vector<72x128xf32>
    %c0_17 = arith.constant 0 : index
    %c0_18 = arith.constant 0 : index
    %34 = vector.load %arg7[%c0_17, %c0_18] : memref<72x128xf32, #tpu.memory_space<vmem>>, vector<72x128xf32>
    tpu.vector_store %arg7[%c0_17, %c0_18], %33 {strides = array<i32>} : memref<72x128xf32, #tpu.memory_space<vmem>>, vector<72x128xf32>,
    return
  }
  func.func @transform_0(%arg0: i32) -> (i32, i32) {
    %c0_i32 = arith.constant 0 : i32
    %c0_i32_0 = arith.constant 0 : i32
    return %arg0, %c0_i32 : i32, i32
  }
  func.func @transform_1(%arg0: i32) -> (i32, i32) {
    %c0_i32 = arith.constant 0 : i32
    %c0_i32_0 = arith.constant 0 : i32
    return %arg0, %c0_i32 : i32, i32
  }
  func.func @transform_2(%arg0: i32) -> (i32, i32) {
    %c0_i32 = arith.constant 0 : i32
    %c0_i32_0 = arith.constant 0 : i32
    return %arg0, %c0_i32 : i32, i32
  }
  func.func @transform_3(%arg0: i32) -> (i32, i32) {
    %c0_i32 = arith.constant 0 : i32
    %c0_i32_0 = arith.constant 0 : i32
    return %arg0, %c0_i32 : i32, i32
  }
  func.func @transform_4(%arg0: i32) -> (i32, i32) {
    %c0_i32 = arith.constant 0 : i32
    %c0_i32_0 = arith.constant 0 : i32
    %c0_i32_1 = arith.constant 0 : i32
    return %c0_i32, %c0_i32_0 : i32, i32
  }
  func.func @transform_5(%arg0: i32) -> (i32, i32) {
    %c0_i32 = arith.constant 0 : i32
    %c0_i32_0 = arith.constant 0 : i32
    %c0_i32_1 = arith.constant 0 : i32
    return %c0_i32, %c0_i32_0 : i32, i32
  }
  func.func @transform_6(%arg0: i32) -> (i32, i32) {
    %c0_i32 = arith.constant 0 : i32
    %c0_i32_0 = arith.constant 0 : i32
    return %arg0, %c0_i32 : i32, i32
  }
}

</mosaic_0001>

<llo_original>
// kernel: tpu_custom_call.1
$region0: #{tpu_custom_call.1}
  #allocation0 [shape = 'u32[]', space=smem, size = 0x4, offset = 0x4, fixed_abs, tag = 'smem constant byte address 0x4 - core index']
  #allocation1 [shape = 'u32[72,128]{1,0:T(1,128)}', space=vmem, size = 0x9000, scoped, tag = 'internal scratch']
  %s0 = inlined_call_operand.hbm [shape: f32[72,128], index: 0, kind: input, shape index: {}]
  %s1 = inlined_call_operand.hbm [shape: f32[72,128], index: 1, kind: input, shape index: {}]
  %s2 = inlined_call_operand.hbm [shape: f32[72,128], index: 2, kind: input, shape index: {}]
  %s3 = inlined_call_operand.hbm [shape: f32[72,128], index: 3, kind: input, shape index: {}]
  %s4 = inlined_call_operand.hbm [shape: f32[128,128], index: 4, kind: input, shape index: {}]
  %s5 = inlined_call_operand.vmem [shape: f32[1,128], index: 5, kind: input, shape index: {}]
  %s6 = inlined_call_operand.hbm [shape: f32[72,128], index: 6, kind: output, shape index: {}]
  %s7 = sld [smem:[#allocation0]]
  $region54: #{tpu_custom_call.1} parent=0
    _
  %s9 = ssub.s32 1, %s7
  %s10 = scalar_select 0, %s9, %s7
  $region1: #{tpu_custom_call.1} parent=0
    #allocation2 [shape = 'u8[36864]{0}', space=vmem, size = 0x9000, scoped, tag = 'input window, operand 0, single buffered']
    #allocation3 [shape = 's32[1]{0}', space=sflag, size = 0x4, scoped, tag = 'scoped memory for tpu_custom_call.1']
    #allocation4 [shape = 's32[1]{0}', space=sflag, size = 0x4, scoped, tag = 'scoped memory for tpu_custom_call.1']
    #allocation5 [shape = 'u8[36864]{0}', space=vmem, size = 0x9000, scoped, tag = 'input window, operand 1, single buffered']
    #allocation6 [shape = 's32[1]{0}', space=sflag, size = 0x4, scoped, tag = 'scoped memory for tpu_custom_call.1']
    #allocation7 [shape = 'u8[36864]{0}', space=vmem, size = 0x9000, scoped, tag = 'input window, operand 2, single buffered']
    #allocation8 [shape = 'u8[36864]{0}', space=vmem, size = 0x9000, scoped, tag = 'input window, operand 3, single buffered']
    #allocation9 [shape = 's32[1]{0}', space=sflag, size = 0x4, scoped, tag = 'scoped memory for tpu_custom_call.1']
    #allocation10 [shape = 'u8[65536]{0}', space=vmem, size = 0x10000, scoped, tag = 'input window, operand 4, single buffered']
    #allocation11 [shape = 'u8[36864]{0}', space=vmem, size = 0x9000, scoped, tag = 'output window, operand 0, single buffered']
    %11 = vsyncpa [#allocation3], 0
    %12 = vsyncpa [#allocation6], 0
    %13 = vsyncpa [#allocation9], 0
    %14 = vsyncpa [#allocation4], 0
    // Predicated region
    $region2: #{tpu_custom_call.1} parent=1 // pred_check
      _
    $region3: #{tpu_custom_call.1} parent=1 // pred_check_branch
      %16 = sbr.rel (0) target = $region5
    $region4: #{tpu_custom_call.1} parent=1 // pred_region
      %18 = vsyncadd [#allocation3], 0
      %s19 = sshll.u32 %s0, 4
      %s20 = int_to_ptr.hbm [resolvable:$true] %s19
      %s21 = sshll.u32 [#allocation2], 4
      %s22 = int_to_ptr.vmem [resolvable:$true] %s21
      %27 = dma.hbm_to_vmem [thread:$0]  %s20, 1152, %s22, [#allocation3], 128, 128, 8
    $region5: #{tpu_custom_call.1} parent=1 // pred_fallthru
      _
    // Predicated region
    $region6: #{tpu_custom_call.1} parent=1 // pred_check
      _
    $region7: #{tpu_custom_call.1} parent=1 // pred_check_branch
      %29 = sbr.rel (0) target = $region9
    $region8: #{tpu_custom_call.1} parent=1 // pred_region
      %31 = vsyncadd [#allocation6], 0
      %s32 = sshll.u32 %s1, 4
      %s33 = int_to_ptr.hbm [resolvable:$true] %s32
      %s34 = sshll.u32 [#allocation5], 4
      %s35 = int_to_ptr.vmem [resolvable:$true] %s34
      %40 = dma.hbm_to_vmem [thread:$0]  %s33, 1152, %s35, [#allocation6], 128, 128, 8
    $region9: #{tpu_custom_call.1} parent=1 // pred_fallthru
      _
    // Predicated region
    $region10: #{tpu_custom_call.1} parent=1 // pred_check
      _
    $region11: #{tpu_custom_call.1} parent=1 // pred_check_branch
      %42 = sbr.rel (0) target = $region13
    $region12: #{tpu_custom_call.1} parent=1 // pred_region
      %44 = vsyncadd [#allocation6], 0
      %s45 = sshll.u32 %s2, 4
      %s46 = int_to_ptr.hbm [resolvable:$true] %s45
      %s47 = sshll.u32 [#allocation7], 4
      %s48 = int_to_ptr.vmem [resolvable:$true] %s47
      %53 = dma.hbm_to_vmem [thread:$0]  %s46, 1152, %s48, [#allocation6], 128, 128, 8
    $region13: #{tpu_custom_call.1} parent=1 // pred_fallthru
      _
    // Predicated region
    $region14: #{tpu_custom_call.1} parent=1 // pred_check
      _
    $region15: #{tpu_custom_call.1} parent=1 // pred_check_branch
      %55 = sbr.rel (0) target = $region17
    $region16: #{tpu_custom_call.1} parent=1 // pred_region
      %57 = vsyncadd [#allocation9], 0
      %s58 = sshll.u32 %s3, 4
      %s59 = int_to_ptr.hbm [resolvable:$true] %s58
      %s60 = sshll.u32 [#allocation8], 4
      %s61 = int_to_ptr.vmem [resolvable:$true] %s60
      %66 = dma.hbm_to_vmem [thread:$0]  %s59, 1152, %s61, [#allocation9], 128, 128, 8
    $region17: #{tpu_custom_call.1} parent=1 // pred_fallthru
      _
    // Predicated region
    $region18: #{tpu_custom_call.1} parent=1 // pred_check
      _
    $region19: #{tpu_custom_call.1} parent=1 // pred_check_branch
      %68 = sbr.rel (0) target = $region21
    $region20: #{tpu_custom_call.1} parent=1 // pred_region
      %70 = vsyncadd [#allocation9], 0
      %s71 = sshll.u32 %s4, 4
      %s72 = int_to_ptr.hbm [resolvable:$true] %s71
      %s73 = sshll.u32 [#allocation10], 4
      %s74 = int_to_ptr.vmem [resolvable:$true] %s73
      %79 = dma.hbm_to_vmem [thread:$0]  %s72, 2048, %s74, [#allocation9], 128, 128, 8
    $region21: #{tpu_custom_call.1} parent=1 // pred_fallthru
      _
    // Predicated region
    $region22: #{tpu_custom_call.1} parent=1 // pred_check
      _
    $region23: #{tpu_custom_call.1} parent=1 // pred_check_branch
      %81 = sbr.rel (0) target = $region25
    $region24: #{tpu_custom_call.1} parent=1 // pred_region
      _
    $region25: #{tpu_custom_call.1} parent=1 // pred_fallthru
      _
    // Predicated region
    $region26: #{tpu_custom_call.1} parent=1 // pred_check
      _
    $region27: #{tpu_custom_call.1} parent=1 // pred_check_branch
      %83 = sbr.rel (0) target = $region29
    $region28: #{tpu_custom_call.1} parent=1 // pred_region
      %85 = dma.done [#allocation3], 1152
    $region29: #{tpu_custom_call.1} parent=1 // pred_fallthru
      _
    // Predicated region
    $region30: #{tpu_custom_call.1} parent=1 // pred_check
      _
    $region31: #{tpu_custom_call.1} parent=1 // pred_check_branch
      %87 = sbr.rel (0) target = $region33
    $region32: #{tpu_custom_call.1} parent=1 // pred_region
      %89 = dma.done [#allocation6], 1152
    $region33: #{tpu_custom_call.1} parent=1 // pred_fallthru
      _
    // Predicated region
    $region34: #{tpu_custom_call.1} parent=1 // pred_check
      _
    $region35: #{tpu_custom_call.1} parent=1 // pred_check_branch
      %91 = sbr.rel (0) target = $region37
    $region36: #{tpu_custom_call.1} parent=1 // pred_region
      %93 = dma.done [#allocation6], 1152
    $region37: #{tpu_custom_call.1} parent=1 // pred_fallthru
      _
    // Predicated region
    $region38: #{tpu_custom_call.1} parent=1 // pred_check
      _
    $region39: #{tpu_custom_call.1} parent=1 // pred_check_branch
      %95 = sbr.rel (0) target = $region41
    $region40: #{tpu_custom_call.1} parent=1 // pred_region
      %97 = dma.done [#allocation9], 1152
    $region41: #{tpu_custom_call.1} parent=1 // pred_fallthru
      _
    // Predicated region
    $region42: #{tpu_custom_call.1} parent=1 // pred_check
      _
    $region43: #{tpu_custom_call.1} parent=1 // pred_check_branch
      %99 = sbr.rel (0) target = $region45
    $region44: #{tpu_custom_call.1} parent=1 // pred_region
      %101 = dma.done [#allocation9], 2048
    $region45: #{tpu_custom_call.1} parent=1 // pred_fallthru
      _
    %v102 = vld [vmem:[#allocation8] sm:$0xff]
    %v103 = vld [vmem:[#allocation8 + $0x8] sm:$0xff]
    %v104 = vld [vmem:[#allocation8 + $0x10] sm:$0xff]
    %v105 = vld [vmem:[#allocation8 + $0x18] sm:$0xff]
    %v106 = vld [vmem:[#allocation8 + $0x20] sm:$0xff]
    %v107 = vld [vmem:[#allocation8 + $0x28] sm:$0xff]
    %v108 = vld [vmem:[#allocation8 + $0x30] sm:$0xff]
    %v109 = vld [vmem:[#allocation8 + $0x38] sm:$0xff]
    %v110 = vld [vmem:[#allocation8 + $0x40] sm:$0xff]
    %v111 = vld [vmem:[#allocation10] sm:$0xff]
    %v112 = vld [vmem:[#allocation10 + $0x8] sm:$0xff]
    %v113 = vld [vmem:[#allocation10 + $0x10] sm:$0xff]
    %v114 = vld [vmem:[#allocation10 + $0x18] sm:$0xff]
    %v115 = vld [vmem:[#allocation10 + $0x20] sm:$0xff]
    %v116 = vld [vmem:[#allocation10 + $0x28] sm:$0xff]
    %v117 = vld [vmem:[#allocation10 + $0x30] sm:$0xff]
    %v118 = vld [vmem:[#allocation10 + $0x38] sm:$0xff]
    %v119 = vld [vmem:[#allocation10 + $0x40] sm:$0xff]
    %v120 = vld [vmem:[#allocation10 + $0x48] sm:$0xff]
    %v121 = vld [vmem:[#allocation10 + $0x50] sm:$0xff]
    %v122 = vld [vmem:[#allocation10 + $0x58] sm:$0xff]
    %v123 = vld [vmem:[#allocation10 + $0x60] sm:$0xff]
    %v124 = vld [vmem:[#allocation10 + $0x68] sm:$0xff]
    %v125 = vld [vmem:[#allocation10 + $0x70] sm:$0xff]
    %v126 = vld [vmem:[#allocation10 + $0x78] sm:$0xff]
    %v127 = vld [vmem:[#allocation2] sm:$0xff]
    %v128 = vld [vmem:[#allocation2 + $0x8] sm:$0xff]
    %v129 = vld [vmem:[#allocation2 + $0x10] sm:$0xff]
    %v130 = vld [vmem:[#allocation2 + $0x18] sm:$0xff]
    %v131 = vld [vmem:[#allocation2 + $0x20] sm:$0xff]
    %v132 = vld [vmem:[#allocation2 + $0x28] sm:$0xff]
    %v133 = vld [vmem:[#allocation2 + $0x30] sm:$0xff]
    %v134 = vld [vmem:[#allocation2 + $0x38] sm:$0xff]
    %v135 = vld [vmem:[#allocation2 + $0x40] sm:$0xff]
    %136 = vmatpush.msra.mxu0 %v126
    %137 = vmatpush.msra.mxu0 %v125
    %138 = vmatpush.msra.mxu0 %v124
    %139 = vmatpush.msra.mxu0 %v123
    %140 = vmatpush.msra.mxu0 %v122
    %141 = vmatpush.msra.mxu0 %v121
    %142 = vmatpush.msra.mxu0 %v120
    %143 = vmatpush.msra.mxu0 %v119
    %144 = vmatpush.msra.mxu0 %v118
    %145 = vmatpush.msra.mxu0 %v117
    %146 = vmatpush.msra.mxu0 %v116
    %147 = vmatpush.msra.mxu0 %v115
    %148 = vmatpush.msra.mxu0 %v114
    %149 = vmatpush.msra.mxu0 %v113
    %150 = vmatpush.msra.mxu0 %v112
    %151 = vmatpush.msra.mxu0 %v111
    %152 = vmatmul.f32.gmra.mxu0 %v102
    %v153 = vpop.f32.mrf.mxu0
    %v154 = vadd.f32 %v127, %v153
    %155 = vmatmul.f32.gmra.mxu0 %v103
    %v156 = vpop.f32.mrf.mxu0
    %v157 = vadd.f32 %v128, %v156
    %158 = vmatmul.f32.gmra.mxu0 %v104
    %v159 = vpop.f32.mrf.mxu0
    %v160 = vadd.f32 %v129, %v159
    %161 = vmatmul.f32.gmra.mxu0 %v105
    %v162 = vpop.f32.mrf.mxu0
    %v163 = vadd.f32 %v130, %v162
    %164 = vmatmul.f32.gmra.mxu0 %v106
    %v165 = vpop.f32.mrf.mxu0
    %v166 = vadd.f32 %v131, %v165
    %167 = vmatmul.f32.gmra.mxu0 %v107
    %v168 = vpop.f32.mrf.mxu0
    %v169 = vadd.f32 %v132, %v168
    %170 = vmatmul.f32.gmra.mxu0 %v108
    %v171 = vpop.f32.mrf.mxu0
    %v172 = vadd.f32 %v133, %v171
    %173 = vmatmul.f32.gmra.mxu0 %v109
    %v174 = vpop.f32.mrf.mxu0
    %v175 = vadd.f32 %v134, %v174
    %176 = vmatmul.f32.gmra.mxu0 %v110
    %v177 = vpop.f32.mrf.mxu0
    %v178 = vadd.f32 %v135, %v177
    %179 = vdwg.mxu0
    %v180 = vld [vmem:[%s5] sm:$0x1]
    %v182 = vperm.slane %v180, 0
    %v184 = vadd.f32 %v154, %v182
    %v185 = vadd.f32 %v157, %v182
    %v186 = vadd.f32 %v160, %v182
    %v187 = vadd.f32 %v163, %v182
    %v188 = vadd.f32 %v166, %v182
    %v189 = vadd.f32 %v169, %v182
    %v190 = vadd.f32 %v172, %v182
    %v191 = vadd.f32 %v175, %v182
    %v192 = vadd.f32 %v178, %v182
    %v193 = vmax.f32 %v184, 0.0
    %v194 = vmax.f32 %v185, 0.0
    %v195 = vmax.f32 %v186, 0.0
    %v196 = vmax.f32 %v187, 0.0
    %v197 = vmax.f32 %v188, 0.0
    %v198 = vmax.f32 %v189, 0.0
    %v199 = vmax.f32 %v190, 0.0
    %v200 = vmax.f32 %v191, 0.0
    %v201 = vmax.f32 %v192, 0.0
    %202 = vadd.xlane.f32.xlu0 %v102
    %v203 = vpop.xlane.xlu0 %202
    %204 = vadd.xlane.f32.xlu0 %v103
    %v205 = vpop.xlane.xlu0 %204
    %206 = vadd.xlane.f32.xlu0 %v104
    %v207 = vpop.xlane.xlu0 %206
    %208 = vadd.xlane.f32.xlu0 %v105
    %v209 = vpop.xlane.xlu0 %208
    %210 = vadd.xlane.f32.xlu0 %v106
    %v211 = vpop.xlane.xlu0 %210
    %212 = vadd.xlane.f32.xlu0 %v107
    %v213 = vpop.xlane.xlu0 %212
    %214 = vadd.xlane.f32.xlu0 %v108
    %v215 = vpop.xlane.xlu0 %214
    %216 = vadd.xlane.f32.xlu0 %v109
    %v217 = vpop.xlane.xlu0 %216
    %218 = vadd.xlane.f32.xlu0 %v110
    %v219 = vpop.xlane.xlu0 %218
    %v220 = vmul.f32 %v203, 0.03125
    %v221 = vmul.f32 %v205, 0.03125
    %v222 = vmul.f32 %v207, 0.03125
    %v223 = vmul.f32 %v209, 0.03125
    %v224 = vmul.f32 %v211, 0.03125
    %v225 = vmul.f32 %v213, 0.03125
    %v226 = vmul.f32 %v215, 0.03125
    %v227 = vmul.f32 %v217, 0.03125
    %v228 = vmul.f32 %v219, 0.03125
    %v229 = vmul.f32 %v102, %v102
    %v230 = vmul.f32 %v103, %v103
    %v231 = vmul.f32 %v104, %v104
    %v232 = vmul.f32 %v105, %v105
    %v233 = vmul.f32 %v106, %v106
    %v234 = vmul.f32 %v107, %v107
    %v235 = vmul.f32 %v108, %v108
    %v236 = vmul.f32 %v109, %v109
    %v237 = vmul.f32 %v110, %v110
    %238 = vadd.xlane.f32.xlu0 %v229
    %v239 = vpop.xlane.xlu0 %238
    %240 = vadd.xlane.f32.xlu0 %v230
    %v241 = vpop.xlane.xlu0 %240
    %242 = vadd.xlane.f32.xlu0 %v231
    %v243 = vpop.xlane.xlu0 %242
    %244 = vadd.xlane.f32.xlu0 %v232
    %v245 = vpop.xlane.xlu0 %244
    %246 = vadd.xlane.f32.xlu0 %v233
    %v247 = vpop.xlane.xlu0 %246
    %248 = vadd.xlane.f32.xlu0 %v234
    %v249 = vpop.xlane.xlu0 %248
    %250 = vadd.xlane.f32.xlu0 %v235
    %v251 = vpop.xlane.xlu0 %250
    %252 = vadd.xlane.f32.xlu0 %v236
    %v253 = vpop.xlane.xlu0 %252
    %254 = vadd.xlane.f32.xlu0 %v237
    %v255 = vpop.xlane.xlu0 %254
    %v256 = vmul.f32 %v239, 0.03125
    %v257 = vmul.f32 %v241, 0.03125
    %v258 = vmul.f32 %v243, 0.03125
    %v259 = vmul.f32 %v245, 0.03125
    %v260 = vmul.f32 %v247, 0.03125
    %v261 = vmul.f32 %v249, 0.03125
    %v262 = vmul.f32 %v251, 0.03125
    %v263 = vmul.f32 %v253, 0.03125
    %v264 = vmul.f32 %v255, 0.03125
    %v265 = vmul.f32 %v220, %v220
    %v266 = vmul.f32 %v221, %v221
    %v267 = vmul.f32 %v222, %v222
    %v268 = vmul.f32 %v223, %v223
    %v269 = vmul.f32 %v224, %v224
    %v270 = vmul.f32 %v225, %v225
    %v271 = vmul.f32 %v226, %v226
    %v272 = vmul.f32 %v227, %v227
    %v273 = vmul.f32 %v228, %v228
    %v274 = vsub.f32 %v256, %v265
    %v275 = vsub.f32 %v257, %v266
    %v276 = vsub.f32 %v258, %v267
    %v277 = vsub.f32 %v259, %v268
    %v278 = vsub.f32 %v260, %v269
    %v279 = vsub.f32 %v261, %v270
    %v280 = vsub.f32 %v262, %v271
    %v281 = vsub.f32 %v263, %v272
    %v282 = vsub.f32 %v264, %v273
    %v283 = vadd.f32 %v274, 1e-12
    %v284 = vadd.f32 %v275, 1e-12
    %v285 = vadd.f32 %v276, 1e-12
    %v286 = vadd.f32 %v277, 1e-12
    %v287 = vadd.f32 %v278, 1e-12
    %v288 = vadd.f32 %v279, 1e-12
    %v289 = vadd.f32 %v280, 1e-12
    %v290 = vadd.f32 %v281, 1e-12
    %v291 = vadd.f32 %v282, 1e-12
    %v292 = vmul.f32 %v283, %v283
    %v293 = vmul.f32 %v284, %v284
    %v294 = vmul.f32 %v285, %v285
    %v295 = vmul.f32 %v286, %v286
    %v296 = vmul.f32 %v287, %v287
    %v297 = vmul.f32 %v288, %v288
    %v298 = vmul.f32 %v289, %v289
    %v299 = vmul.f32 %v290, %v290
    %v300 = vmul.f32 %v291, %v291
    %v301 = vrcp.pop %v292
    %v302 = vmul.f32 %v292, %v301
    %v303 = vsub.f32 1.0, %v302
    %v304 = vmul.f32 %v301, %v303
    %v305 = vadd.f32 %v301, %v304
    %vm306 = vweird.f32 %v292
    %vm307 = vweird.f32 %v301
    %vm308 = vmor %vm306, %vm307
    %v309 = vsel %vm308, %v301, %v305
    %v310 = vand.u32 2147483647, %v292
    %vm311 = vcmp.eq.f32.partialorder %v310, 8.507059e+37
    %v312 = vand.u32 %v292, 2147483648
    %v313 = vor.u32 1.1754944e-38, %v312
    %v314 = vsel %vm311, %v313, %v309
    %v315 = vrcp.pop %v293
    %v316 = vmul.f32 %v293, %v315
    %v317 = vsub.f32 1.0, %v316
    %v318 = vmul.f32 %v315, %v317
    %v319 = vadd.f32 %v315, %v318
    %vm320 = vweird.f32 %v293
    %vm321 = vweird.f32 %v315
    %vm322 = vmor %vm320, %vm321
    %v323 = vsel %vm322, %v315, %v319
    %v324 = vand.u32 2147483647, %v293
    %vm325 = vcmp.eq.f32.partialorder %v324, 8.507059e+37
    %v326 = vand.u32 %v293, 2147483648
    %v327 = vor.u32 1.1754944e-38, %v326
    %v328 = vsel %vm325, %v327, %v323
    %v329 = vrcp.pop %v294
    %v330 = vmul.f32 %v294, %v329
    %v331 = vsub.f32 1.0, %v330
    %v332 = vmul.f32 %v329, %v331
    %v333 = vadd.f32 %v329, %v332
    %vm334 = vweird.f32 %v294
    %vm335 = vweird.f32 %v329
    %vm336 = vmor %vm334, %vm335
    %v337 = vsel %vm336, %v329, %v333
    %v338 = vand.u32 2147483647, %v294
    %vm339 = vcmp.eq.f32.partialorder %v338, 8.507059e+37
    %v340 = vand.u32 %v294, 2147483648
    %v341 = vor.u32 1.1754944e-38, %v340
    %v342 = vsel %vm339, %v341, %v337
    %v343 = vrcp.pop %v295
    %v344 = vmul.f32 %v295, %v343
    %v345 = vsub.f32 1.0, %v344
    %v346 = vmul.f32 %v343, %v345
    %v347 = vadd.f32 %v343, %v346
    %vm348 = vweird.f32 %v295
    %vm349 = vweird.f32 %v343
    %vm350 = vmor %vm348, %vm349
    %v351 = vsel %vm350, %v343, %v347
    %v352 = vand.u32 2147483647, %v295
    %vm353 = vcmp.eq.f32.partialorder %v352, 8.507059e+37
    %v354 = vand.u32 %v295, 2147483648
    %v355 = vor.u32 1.1754944e-38, %v354
    %v356 = vsel %vm353, %v355, %v351
    %v357 = vrcp.pop %v296
    %v358 = vmul.f32 %v296, %v357
    %v359 = vsub.f32 1.0, %v358
    %v360 = vmul.f32 %v357, %v359
    %v361 = vadd.f32 %v357, %v360
    %vm362 = vweird.f32 %v296
    %vm363 = vweird.f32 %v357
    %vm364 = vmor %vm362, %vm363
    %v365 = vsel %vm364, %v357, %v361
    %v366 = vand.u32 2147483647, %v296
    %vm367 = vcmp.eq.f32.partialorder %v366, 8.507059e+37
    %v368 = vand.u32 %v296, 2147483648
    %v369 = vor.u32 1.1754944e-38, %v368
    %v370 = vsel %vm367, %v369, %v365
    %v371 = vrcp.pop %v297
    %v372 = vmul.f32 %v297, %v371
    %v373 = vsub.f32 1.0, %v372
    %v374 = vmul.f32 %v371, %v373
    %v375 = vadd.f32 %v371, %v374
    %vm376 = vweird.f32 %v297
    %vm377 = vweird.f32 %v371
    %vm378 = vmor %vm376, %vm377
    %v379 = vsel %vm378, %v371, %v375
    %v380 = vand.u32 2147483647, %v297
    %vm381 = vcmp.eq.f32.partialorder %v380, 8.507059e+37
    %v382 = vand.u32 %v297, 2147483648
    %v383 = vor.u32 1.1754944e-38, %v382
    %v384 = vsel %vm381, %v383, %v379
    %v385 = vrcp.pop %v298
    %v386 = vmul.f32 %v298, %v385
    %v387 = vsub.f32 1.0, %v386
    %v388 = vmul.f32 %v385, %v387
    %v389 = vadd.f32 %v385, %v388
    %vm390 = vweird.f32 %v298
    %vm391 = vweird.f32 %v385
    %vm392 = vmor %vm390, %vm391
    %v393 = vsel %vm392, %v385, %v389
    %v394 = vand.u32 2147483647, %v298
    %vm395 = vcmp.eq.f32.partialorder %v394, 8.507059e+37
    %v396 = vand.u32 %v298, 2147483648
    %v397 = vor.u32 1.1754944e-38, %v396
    %v398 = vsel %vm395, %v397, %v393
    %v399 = vrcp.pop %v299
    %v400 = vmul.f32 %v299, %v399
    %v401 = vsub.f32 1.0, %v400
    %v402 = vmul.f32 %v399, %v401
    %v403 = vadd.f32 %v399, %v402
    %vm404 = vweird.f32 %v299
    %vm405 = vweird.f32 %v399
    %vm406 = vmor %vm404, %vm405
    %v407 = vsel %vm406, %v399, %v403
    %v408 = vand.u32 2147483647, %v299
    %vm409 = vcmp.eq.f32.partialorder %v408, 8.507059e+37
    %v410 = vand.u32 %v299, 2147483648
    %v411 = vor.u32 1.1754944e-38, %v410
    %v412 = vsel %vm409, %v411, %v407
    %v413 = vrcp.pop %v300
    %v414 = vmul.f32 %v300, %v413
    %v415 = vsub.f32 1.0, %v414
    %v416 = vmul.f32 %v413, %v415
    %v417 = vadd.f32 %v413, %v416
    %vm418 = vweird.f32 %v300
    %vm419 = vweird.f32 %v413
    %vm420 = vmor %vm418, %vm419
    %v421 = vsel %vm420, %v413, %v417
    %v422 = vand.u32 2147483647, %v300
    %vm423 = vcmp.eq.f32.partialorder %v422, 8.507059e+37
    %v424 = vand.u32 %v300, 2147483648
    %v425 = vor.u32 1.1754944e-38, %v424
    %v426 = vsel %vm423, %v425, %v421
    %v427 = vsub.f32 %v102, %v220
    %v428 = vsub.f32 %v103, %v221
    %v429 = vsub.f32 %v104, %v222
    %v430 = vsub.f32 %v105, %v223
    %v431 = vsub.f32 %v106, %v224
    %v432 = vsub.f32 %v107, %v225
    %v433 = vsub.f32 %v108, %v226
    %v434 = vsub.f32 %v109, %v227
    %v435 = vsub.f32 %v110, %v228
    %v436 = vmul.f32 %v427, %v314
    %v437 = vmul.f32 %v428, %v328
    %v438 = vmul.f32 %v429, %v342
    %v439 = vmul.f32 %v430, %v356
    %v440 = vmul.f32 %v431, %v370
    %v441 = vmul.f32 %v432, %v384
    %v442 = vmul.f32 %v433, %v398
    %v443 = vmul.f32 %v434, %v412
    %v444 = vmul.f32 %v435, %v426
    %v445 = vld [vmem:[#allocation7] sm:$0xff]
    %v446 = vld [vmem:[#allocation7 + $0x8] sm:$0xff]
    %v447 = vld [vmem:[#allocation7 + $0x10] sm:$0xff]
    %v448 = vld [vmem:[#allocation7 + $0x18] sm:$0xff]
    %v449 = vld [vmem:[#allocation7 + $0x20] sm:$0xff]
    %v450 = vld [vmem:[#allocation7 + $0x28] sm:$0xff]
    %v451 = vld [vmem:[#allocation7 + $0x30] sm:$0xff]
    %v452 = vld [vmem:[#allocation7 + $0x38] sm:$0xff]
    %v453 = vld [vmem:[#allocation7 + $0x40] sm:$0xff]
    %v454 = vmul.f32 %v436, %v445
    %v455 = vmul.f32 %v437, %v446
    %v456 = vmul.f32 %v438, %v447
    %v457 = vmul.f32 %v439, %v448
    %v458 = vmul.f32 %v440, %v449
    %v459 = vmul.f32 %v441, %v450
    %v460 = vmul.f32 %v442, %v451
    %v461 = vmul.f32 %v443, %v452
    %v462 = vmul.f32 %v444, %v453
    %v463 = vld [vmem:[#allocation5] sm:$0xff]
    %v464 = vld [vmem:[#allocation5 + $0x8] sm:$0xff]
    %v465 = vld [vmem:[#allocation5 + $0x10] sm:$0xff]
    %v466 = vld [vmem:[#allocation5 + $0x18] sm:$0xff]
    %v467 = vld [vmem:[#allocation5 + $0x20] sm:$0xff]
    %v468 = vld [vmem:[#allocation5 + $0x28] sm:$0xff]
    %v469 = vld [vmem:[#allocation5 + $0x30] sm:$0xff]
    %v470 = vld [vmem:[#allocation5 + $0x38] sm:$0xff]
    %v471 = vld [vmem:[#allocation5 + $0x40] sm:$0xff]
    %v472 = vadd.f32 %v454, %v463
    %v473 = vadd.f32 %v455, %v464
    %v474 = vadd.f32 %v456, %v465
    %v475 = vadd.f32 %v457, %v466
    %v476 = vadd.f32 %v458, %v467
    %v477 = vadd.f32 %v459, %v468
    %v478 = vadd.f32 %v460, %v469
    %v479 = vadd.f32 %v461, %v470
    %v480 = vadd.f32 %v462, %v471
    %v481 = vadd.f32 %v193, %v472
    %v482 = vadd.f32 %v194, %v473
    %v483 = vadd.f32 %v195, %v474
    %v484 = vadd.f32 %v196, %v475
    %v485 = vadd.f32 %v197, %v476
    %v486 = vadd.f32 %v198, %v477
    %v487 = vadd.f32 %v199, %v478
    %v488 = vadd.f32 %v200, %v479
    %v489 = vadd.f32 %v201, %v480
    %490 = vst [vmem:[#allocation11] sm:$0xff] %v481
    %491 = vst [vmem:[#allocation11 + $0x8] sm:$0xff] %v482
    %492 = vst [vmem:[#allocation11 + $0x10] sm:$0xff] %v483
    %493 = vst [vmem:[#allocation11 + $0x18] sm:$0xff] %v484
    %494 = vst [vmem:[#allocation11 + $0x20] sm:$0xff] %v485
    %495 = vst [vmem:[#allocation11 + $0x28] sm:$0xff] %v486
    %496 = vst [vmem:[#allocation11 + $0x30] sm:$0xff] %v487
    %497 = vst [vmem:[#allocation11 + $0x38] sm:$0xff] %v488
    %498 = vst [vmem:[#allocation11 + $0x40] sm:$0xff] %v489
    // Predicated region
    $region46: #{tpu_custom_call.1} parent=1 // pred_check
      _
    $region47: #{tpu_custom_call.1} parent=1 // pred_check_branch
      %500 = sbr.rel (0) target = $region49
    $region48: #{tpu_custom_call.1} parent=1 // pred_region
      %502 = vsyncadd [#allocation4], 0
      %s503 = sshll.u32 [#allocation11], 4
      %s504 = int_to_ptr.vmem [resolvable:$true] %s503
      %s505 = sshll.u32 %s6, 4
      %s506 = int_to_ptr.hbm [resolvable:$true] %s505
      %511 = dma.vmem_to_hbm [thread:$0]  %s504, 1152, %s506, [#allocation4], 128, 128, 8
    $region49: #{tpu_custom_call.1} parent=1 // pred_fallthru
      _
    // Predicated region
    $region50: #{tpu_custom_call.1} parent=1 // pred_check
      _
    $region51: #{tpu_custom_call.1} parent=1 // pred_check_branch
      %513 = sbr.rel (0) target = $region53
    $region52: #{tpu_custom_call.1} parent=1 // pred_region
      %515 = dma.done [#allocation4], 1152
    $region53: #{tpu_custom_call.1} parent=1 // pred_fallthru
      _
    %516 = vsyncpa [#allocation3], 1
    %517 = vsyncpa [#allocation6], 1
    %518 = vsyncpa [#allocation9], 1
    %519 = vsyncpa [#allocation4], 1

</llo_original>
